<compile_context>
chip_gen: v7x
topology: tpu7x:2x2x1
jax: 0.10.0
libtpu: 0.0.40
codegen_flags: <defaults>
</compile_context>

<pallas_src>
import functools

import jax
import jax.numpy as jnp
from jax.experimental import pallas as pl
from jax.experimental.pallas import tpu as pltpu

_LANES = 128
_SUBLANES = 8


def _round_up(x, m):
    return -(-x // m) * m


def _as_rows128(x):
    """View x as a (rows, 128) slab with rows % 8 == 0 (zero-pad only if ragged)."""
    flat = x.reshape(-1)
    n = flat.shape[0]
    rows = _round_up(pl.cdiv(n, _LANES), _SUBLANES)
    pad = rows * _LANES - n
    if pad:
        flat = jnp.pad(flat, (0, pad))          # only for ragged sizes
    return flat.reshape(rows, _LANES), n


def _partials_kernel(x_ref, t_ref, st_ref, xt_ref, *, total_rows):
    """Per-block (8,128) partial sums of (x+t) and (x*t); hang-over rows masked."""
    i = pl.program_id(0)
    tr = x_ref.shape[0]
    row0 = i * tr
    iota8 = jax.lax.broadcasted_iota(jnp.int32, (_SUBLANES, _LANES), 0)

    acc_s = jnp.zeros((_SUBLANES, _LANES), jnp.float32)
    acc_p = jnp.zeros((_SUBLANES, _LANES), jnp.float32)
    for k in range(tr // _SUBLANES):            # static, unrolled; small live set
        sl = slice(k * _SUBLANES, (k + 1) * _SUBLANES)
        xk = x_ref[sl, :].astype(jnp.float32)
        tk = t_ref[sl, :].astype(jnp.float32)
        valid = (row0 + k * _SUBLANES + iota8) < total_rows
        acc_s = acc_s + jnp.where(valid, xk + tk, 0.0)
        acc_p = acc_p + jnp.where(valid, xk * tk, 0.0)

    st_ref[...] = acc_s
    xt_ref[...] = acc_p


def _dice_kernel(coef_ref, x_ref, t_ref, o_ref):
    """loss = c0 - (x*t)*c1 with c0 = 1 - smooth/denom, c1 = 2/denom (from SMEM)."""
    c0 = coef_ref[0]
    c1 = coef_ref[1]
    prod = x_ref[...].astype(jnp.float32) * t_ref[...].astype(jnp.float32)
    o_ref[...] = (c0 - prod * c1).astype(o_ref.dtype)


def dice_loss(inputs, targets, smooth=1.0, reduction="none", *, block_rows=1024):
    if reduction not in ("none", "mean", "sum"):
        raise ValueError()
    smooth = float(smooth)
    orig_shape = inputs.shape

    # Keep original dtypes; kernels upcast in-register.
    x2d, n = _as_rows128(inputs)
    t2d, _ = _as_rows128(targets)
    rows = x2d.shape[0]

    block_rows = max(_SUBLANES, _round_up(int(block_rows), _SUBLANES))
    tr = min(block_rows, rows)
    num_blocks = pl.cdiv(rows, tr)

    tile = pl.BlockSpec((tr, _LANES), lambda i: (i, 0))
    part = pl.BlockSpec((_SUBLANES, _LANES), lambda i: (i, 0))

    # Pass 1: per-block partial sums — fully parallel (v7x megacore friendly).
    # NOTE: if you sweep block_rows > ~2048 on v5e, also raise
    # vmem_limit_bytes via pltpu.CompilerParams.
    st, xt = pl.pallas_call(
        functools.partial(_partials_kernel, total_rows=rows),
        out_shape=(
            jax.ShapeDtypeStruct((num_blocks * _SUBLANES, _LANES), jnp.float32),
            jax.ShapeDtypeStruct((num_blocks * _SUBLANES, _LANES), jnp.float32),
        ),
        grid=(num_blocks,),
        in_specs=[tile, tile],
        out_specs=(part, part),
        compiler_params=pltpu.CompilerParams(
            dimension_semantics=("parallel",)),
    )(x2d, t2d)

    denom = jnp.sum(st) + smooth          # inputs.sum() + targets.sum() + smooth

    if reduction in ("mean", "sum"):
        # Closed form: sum(loss) = N - (2*sum(x*t) + N*smooth)/denom.
        n_f = float(n)
        total = n_f - (2.0 * jnp.sum(xt) + n_f * smooth) / denom
        return total / n_f if reduction == "mean" else total

    inv = 1.0 / denom
    coefs = jnp.stack([1.0 - smooth * inv, 2.0 * inv]).astype(jnp.float32)

    out_dtype = jnp.promote_types(inputs.dtype, targets.dtype)
    if not jnp.issubdtype(out_dtype, jnp.floating):
        out_dtype = jnp.float32

    # Pass 2: elementwise dice loss, lane-dense 128-wide output tiles.
    loss2d = pl.pallas_call(
        _dice_kernel,
        out_shape=jax.ShapeDtypeStruct((rows, _LANES), out_dtype),
        grid=(num_blocks,),
        in_specs=[
            pl.BlockSpec((2,), lambda i: (0,), memory_space=pltpu.SMEM),
            tile,
            tile,
        ],
        out_specs=tile,
        compiler_params=pltpu.CompilerParams(
            dimension_semantics=("parallel",)),
    )(coefs, x2d, t2d)

    loss_flat = loss2d.reshape(-1)
    if loss_flat.shape[0] != n:
        loss_flat = loss_flat[:n]          # only for ragged sizes
    return loss_flat.reshape(orig_shape)


def _dice_loss_ref(inputs, targets, smooth=1.0):
    inputs = inputs.astype(jnp.float32)
    targets = targets.astype(jnp.float32)
    intersection = inputs * targets
    dice = (2.0 * intersection + smooth) / (
        jnp.sum(inputs) + jnp.sum(targets) + smooth)
    return 1.0 - dice


if __name__ == "__main__":
    key = jax.random.PRNGKey(0)
    k1, k2, k3, k4 = jax.random.split(key, 4)

    # NCHW: batch=2, channels=4, spatial=16x16 (copy-free aligned path).
    x = jax.random.uniform(k1, (2, 4, 16, 16), dtype=jnp.float32)
    t = (jax.random.uniform(k2, (2, 4, 16, 16)) > 0.5).astype(jnp.float32)

    loss = jax.block_until_ready(dice_loss(x, t, smooth=1.0, reduction="none"))
    ref = _dice_loss_ref(x, t, smooth=1.0)
    assert loss.shape == x.shape
    assert jnp.allclose(loss, ref, atol=1e-5, rtol=1e-5)

    # Closed-form single-pass reductions.
    for red, ref_red in (("mean", jnp.mean(ref)), ("sum", jnp.sum(ref))):
        val = jax.block_until_ready(dice_loss(x, t, smooth=1.0, reduction=red))
        assert jnp.allclose(val, ref_red, atol=1e-4, rtol=1e-5), (red, val, ref_red)

    # Ragged size + partial (hang-over) last block: exercises in-kernel masking.
    x2 = jax.random.uniform(k3, (2, 3, 30, 40), dtype=jnp.float32)
    t2 = (jax.random.uniform(k4, (2, 3, 30, 40)) > 0.5).astype(jnp.float32)
    loss2 = jax.block_until_ready(
        dice_loss(x2, t2, smooth=1.0, reduction="none", block_rows=48))
    ref2 = _dice_loss_ref(x2, t2, smooth=1.0)
    assert loss2.shape == x2.shape
    assert jnp.allclose(loss2, ref2, atol=1e-5, rtol=1e-5)

    print("KERNEL_OK")
</pallas_src>

<mosaic_0001>
module attributes {stable_mosaic.version = 11 : i64} {
  func.func @_partials_kernel(%arg0: i32, %arg1: memref<16x128xf32, #tpu.memory_space<vmem>>, %arg2: memref<16x128xf32, #tpu.memory_space<vmem>>, %arg3: memref<8x128xf32, #tpu.memory_space<vmem>>, %arg4: memref<8x128xf32, #tpu.memory_space<vmem>>) attributes {dimension_semantics = [#tpu.dimension_semantics<parallel>], iteration_bounds = array<i64: 1>, scalar_prefetch = 0 : i64, scratch_operands = 0 : i64, tpu.core_type = #tpu.core_type<tc>, window_params = [{transform_indices = @transform_0, window_bounds = array<i64: 16, 128>}, {transform_indices = @transform_1, window_bounds = array<i64: 16, 128>}, {transform_indices = @transform_2, window_bounds = array<i64: 8, 128>}, {transform_indices = @transform_3, window_bounds = array<i64: 8, 128>}]} {
    %c16_i32 = arith.constant 16 : i32
    %0 = arith.muli %arg0, %c16_i32 : i32
    %1 = tpu.iota {dimensions = array<i32: 0>} : vector<8x128xi32>
    %cst = arith.constant 0.000000e+00 : f32
    %2 = vector.broadcast %cst : f32 to vector<8x128xf32>
    %cst_0 = arith.constant 0.000000e+00 : f32
    %3 = vector.broadcast %cst_0 : f32 to vector<8x128xf32>
    %c0 = arith.constant 0 : index
    %c0_1 = arith.constant 0 : index
    %4 = vector.load %arg1[%c0, %c0_1] : memref<16x128xf32, #tpu.memory_space<vmem>>, vector<8x128xf32>
    %c0_2 = arith.constant 0 : index
    %c0_3 = arith.constant 0 : index
    %5 = vector.load %arg2[%c0_2, %c0_3] : memref<16x128xf32, #tpu.memory_space<vmem>>, vector<8x128xf32>
    %c0_i32 = arith.constant 0 : i32
    %6 = arith.addi %0, %c0_i32 : i32
    %7 = vector.broadcast %6 : i32 to vector<8x128xi32>
    %8 = arith.addi %7, %1 : vector<8x128xi32>
    %c16_i32_4 = arith.constant 16 : i32
    %9 = vector.broadcast %c16_i32_4 : i32 to vector<8x128xi32>
    %10 = arith.cmpi slt, %8, %9 : vector<8x128xi32>
    %11 = arith.addf %4, %5 : vector<8x128xf32>
    %cst_5 = arith.constant 0.000000e+00 : f32
    %12 = vector.broadcast %cst_5 : f32 to vector<8x128xf32>
    %13 = arith.select %10, %11, %12 : vector<8x128xi1>, vector<8x128xf32>
    %14 = arith.addf %2, %13 : vector<8x128xf32>
    %15 = arith.mulf %4, %5 : vector<8x128xf32>
    %cst_6 = arith.constant 0.000000e+00 : f32
    %16 = vector.broadcast %cst_6 : f32 to vector<8x128xf32>
    %17 = arith.select %10, %15, %16 : vector<8x128xi1>, vector<8x128xf32>
    %18 = arith.addf %3, %17 : vector<8x128xf32>
    %c8 = arith.constant 8 : index
    %c0_7 = arith.constant 0 : index
    %19 = vector.load %arg1[%c8, %c0_7] : memref<16x128xf32, #tpu.memory_space<vmem>>, vector<8x128xf32>
    %c8_8 = arith.constant 8 : index
    %c0_9 = arith.constant 0 : index
    %20 = vector.load %arg2[%c8_8, %c0_9] : memref<16x128xf32, #tpu.memory_space<vmem>>, vector<8x128xf32>
    %c8_i32 = arith.constant 8 : i32
    %21 = arith.addi %0, %c8_i32 : i32
    %22 = vector.broadcast %21 : i32 to vector<8x128xi32>
    %23 = arith.addi %22, %1 : vector<8x128xi32>
    %c16_i32_10 = arith.constant 16 : i32
    %24 = vector.broadcast %c16_i32_10 : i32 to vector<8x128xi32>
    %25 = arith.cmpi slt, %23, %24 : vector<8x128xi32>
    %26 = arith.addf %19, %20 : vector<8x128xf32>
    %cst_11 = arith.constant 0.000000e+00 : f32
    %27 = vector.broadcast %cst_11 : f32 to vector<8x128xf32>
    %28 = arith.select %25, %26, %27 : vector<8x128xi1>, vector<8x128xf32>
    %29 = arith.addf %14, %28 : vector<8x128xf32>
    %30 = arith.mulf %19, %20 : vector<8x128xf32>
    %cst_12 = arith.constant 0.000000e+00 : f32
    %31 = vector.broadcast %cst_12 : f32 to vector<8x128xf32>
    %32 = arith.select %25, %30, %31 : vector<8x128xi1>, vector<8x128xf32>
    %33 = arith.addf %18, %32 : vector<8x128xf32>
    %c0_13 = arith.constant 0 : index
    %c0_14 = arith.constant 0 : index
    %34 = vector.load %arg3[%c0_13, %c0_14] : memref<8x128xf32, #tpu.memory_space<vmem>>, vector<8x128xf32>
    tpu.vector_store %arg3[%c0_13, %c0_14], %29 {strides = array<i32>} : memref<8x128xf32, #tpu.memory_space<vmem>>, vector<8x128xf32>,
    %c0_15 = arith.constant 0 : index
    %c0_16 = arith.constant 0 : index
    %35 = vector.load %arg4[%c0_15, %c0_16] : memref<8x128xf32, #tpu.memory_space<vmem>>, vector<8x128xf32>
    tpu.vector_store %arg4[%c0_15, %c0_16], %33 {strides = array<i32>} : memref<8x128xf32, #tpu.memory_space<vmem>>, vector<8x128xf32>,
    return
  }
  func.func @transform_0(%arg0: i32) -> (i32, i32) {
    %c0_i32 = arith.constant 0 : i32
    %c0_i32_0 = arith.constant 0 : i32
    return %arg0, %c0_i32 : i32, i32
  }
  func.func @transform_1(%arg0: i32) -> (i32, i32) {
    %c0_i32 = arith.constant 0 : i32
    %c0_i32_0 = arith.constant 0 : i32
    return %arg0, %c0_i32 : i32, i32
  }
  func.func @transform_2(%arg0: i32) -> (i32, i32) {
    %c0_i32 = arith.constant 0 : i32
    %c0_i32_0 = arith.constant 0 : i32
    return %arg0, %c0_i32 : i32, i32
  }
  func.func @transform_3(%arg0: i32) -> (i32, i32) {
    %c0_i32 = arith.constant 0 : i32
    %c0_i32_0 = arith.constant 0 : i32
    return %arg0, %c0_i32 : i32, i32
  }
}

</mosaic_0001>

<llo_original>
// kernel: tpu_custom_call.1
$region0: #{tpu_custom_call.1}
  #allocation0 [shape = 'u32[]', space=smem, size = 0x4, offset = 0x4, fixed_abs, tag = 'smem constant byte address 0x4 - core index']
  #allocation1 [shape = 'u32[144,128]{1,0:T(1,128)}', space=vmem, size = 0x12000, scoped, tag = 'internal scratch']
  %s0 = inlined_call_operand.hbm [shape: f32[16,128], index: 0, kind: input, shape index: {}]
  %s1 = inlined_call_operand.hbm [shape: f32[16,128], index: 1, kind: input, shape index: {}]
  %s2 = inlined_call_operand.hbm [shape: f32[8,128], index: 2, kind: output, shape index: {0}]
  %s3 = inlined_call_operand.hbm [shape: f32[8,128], index: 3, kind: output, shape index: {1}]
  %4 = xla_tuple %s2, %s3
  %s5 = sld [smem:[#allocation0]]
  $region34: #{tpu_custom_call.1} parent=0
    _
  %s7 = ssub.s32 1, %s5
  %s8 = scalar_select 0, %s7, %s5
  $region1: #{tpu_custom_call.1} parent=0
    #allocation2 [shape = 'u8[8192]{0}', space=vmem, size = 0x2000, scoped, tag = 'input window, operand 0, single buffered']
    #allocation3 [shape = 's32[1]{0}', space=sflag, size = 0x4, scoped, tag = 'scoped memory for tpu_custom_call.1']
    #allocation4 [shape = 's32[1]{0}', space=sflag, size = 0x4, scoped, tag = 'scoped memory for tpu_custom_call.1']
    #allocation5 [shape = 'u8[8192]{0}', space=vmem, size = 0x2000, scoped, tag = 'input window, operand 1, single buffered']
    #allocation6 [shape = 's32[1]{0}', space=sflag, size = 0x4, scoped, tag = 'scoped memory for tpu_custom_call.1']
    #allocation7 [shape = 'u8[4096]{0}', space=vmem, size = 0x1000, scoped, tag = 'output window, operand 0, single buffered']
    #allocation8 [shape = 'u8[4096]{0}', space=vmem, size = 0x1000, scoped, tag = 'output window, operand 1, single buffered']
    #allocation9 [shape = 's32[1]{0}', space=sflag, size = 0x4, scoped, tag = 'scoped memory for tpu_custom_call.1']
    %9 = vsyncpa [#allocation3], 0
    %10 = vsyncpa [#allocation6], 0
    %11 = vsyncpa [#allocation4], 0
    %12 = vsyncpa [#allocation9], 0
    // Predicated region
    $region2: #{tpu_custom_call.1} parent=1 // pred_check
      _
    $region3: #{tpu_custom_call.1} parent=1 // pred_check_branch
      %14 = sbr.rel (0) target = $region5
    $region4: #{tpu_custom_call.1} parent=1 // pred_region
      %s16 = ssub.s32 256, 256
      %17 = vsyncadd [#allocation3], %s16
      %s18 = sshll.u32 [#allocation2], 4
      %s19 = int_to_ptr.vmem [resolvable:$true] %s18
      %24 = dma.hbm_to_vmem [thread:$0]  %s0, 256, %s19, [#allocation3], 128, 128, 8
    $region5: #{tpu_custom_call.1} parent=1 // pred_fallthru
      _
    // Predicated region
    $region6: #{tpu_custom_call.1} parent=1 // pred_check
      _
    $region7: #{tpu_custom_call.1} parent=1 // pred_check_branch
      %26 = sbr.rel (0) target = $region9
    $region8: #{tpu_custom_call.1} parent=1 // pred_region
      %s28 = ssub.s32 256, 256
      %29 = vsyncadd [#allocation6], %s28
      %s30 = sshll.u32 [#allocation5], 4
      %s31 = int_to_ptr.vmem [resolvable:$true] %s30
      %36 = dma.hbm_to_vmem [thread:$0]  %s1, 256, %s31, [#allocation6], 128, 128, 8
    $region9: #{tpu_custom_call.1} parent=1 // pred_fallthru
      _
    // Predicated region
    $region10: #{tpu_custom_call.1} parent=1 // pred_check
      _
    $region11: #{tpu_custom_call.1} parent=1 // pred_check_branch
      %38 = sbr.rel (0) target = $region13
    $region12: #{tpu_custom_call.1} parent=1 // pred_region
      %39 = dma.done [#allocation3], 256
    $region13: #{tpu_custom_call.1} parent=1 // pred_fallthru
      _
    // Predicated region
    $region14: #{tpu_custom_call.1} parent=1 // pred_check
      _
    $region15: #{tpu_custom_call.1} parent=1 // pred_check_branch
      %41 = sbr.rel (0) target = $region17
    $region16: #{tpu_custom_call.1} parent=1 // pred_region
      %42 = dma.done [#allocation6], 256
    $region17: #{tpu_custom_call.1} parent=1 // pred_fallthru
      _
    %s43 = smul.u32 0, 16
    %v44 = vlaneseq
    %v45 = vshrl.u32 %v44, 7
    %v46 = vld [vmem:[#allocation2] sm:$0xff]
    %v47 = vld [vmem:[#allocation5] sm:$0xff]
    %v48 = vstv %s43
    %v49 = vadd.s32 %v48, %v45
    %vm50 = vcmp.lt.s32.totalorder %v49, 16
    %v51 = vadd.f32 %v46, %v47
    %v52 = vsel %vm50, %v51, 0.0
    %v53 = vadd.f32 %v52, 0.0
    %v54 = vmul.f32 %v46, %v47
    %v55 = vsel %vm50, %v54, 0.0
    %v56 = vadd.f32 %v55, 0.0
    %v57 = vld [vmem:[#allocation2 + $0x8] sm:$0xff]
    %v58 = vld [vmem:[#allocation5 + $0x8] sm:$0xff]
    %s59 = sadd.s32 %s43, 8
    %v60 = vstv %s59
    %v61 = vadd.s32 %v60, %v45
    %vm62 = vcmp.lt.s32.totalorder %v61, 16
    %v63 = vadd.f32 %v57, %v58
    %v64 = vsel %vm62, %v63, 0.0
    %v65 = vadd.f32 %v53, %v64
    %v66 = vmul.f32 %v57, %v58
    %v67 = vsel %vm62, %v66, 0.0
    %v68 = vadd.f32 %v56, %v67
    %69 = vst [vmem:[#allocation7] sm:$0xff] %v65
    %70 = vst [vmem:[#allocation8] sm:$0xff] %v68
    // Predicated region
    $region18: #{tpu_custom_call.1} parent=1 // pred_check
      _
    $region19: #{tpu_custom_call.1} parent=1 // pred_check_branch
      %72 = sbr.rel (0) target = $region21
    $region20: #{tpu_custom_call.1} parent=1 // pred_region
      %s74 = ssub.s32 128, 128
      %75 = vsyncadd [#allocation4], %s74
      %s77 = sshll.u32 [#allocation7], 4
      %s78 = int_to_ptr.vmem [resolvable:$true] %s77
      %80 = dma.vmem_to_hbm [thread:$0]  %s78, 128, %s2, [#allocation4]
    $region21: #{tpu_custom_call.1} parent=1 // pred_fallthru
      _
    // Predicated region
    $region22: #{tpu_custom_call.1} parent=1 // pred_check
      _
    $region23: #{tpu_custom_call.1} parent=1 // pred_check_branch
      %82 = sbr.rel (0) target = $region25
    $region24: #{tpu_custom_call.1} parent=1 // pred_region
      %s84 = ssub.s32 128, 128
      %85 = vsyncadd [#allocation9], %s84
      %s87 = sshll.u32 [#allocation8], 4
      %s88 = int_to_ptr.vmem [resolvable:$true] %s87
      %90 = dma.vmem_to_hbm [thread:$0]  %s88, 128, %s3, [#allocation9]
    $region25: #{tpu_custom_call.1} parent=1 // pred_fallthru
      _
    // Predicated region
    $region26: #{tpu_custom_call.1} parent=1 // pred_check
      _
    $region27: #{tpu_custom_call.1} parent=1 // pred_check_branch
      %92 = sbr.rel (0) target = $region29
    $region28: #{tpu_custom_call.1} parent=1 // pred_region
      %93 = dma.done [#allocation4], 128
    $region29: #{tpu_custom_call.1} parent=1 // pred_fallthru
      _
    // Predicated region
    $region30: #{tpu_custom_call.1} parent=1 // pred_check
      _
    $region31: #{tpu_custom_call.1} parent=1 // pred_check_branch
      %95 = sbr.rel (0) target = $region33
    $region32: #{tpu_custom_call.1} parent=1 // pred_region
      %96 = dma.done [#allocation9], 128
    $region33: #{tpu_custom_call.1} parent=1 // pred_fallthru
      _
    %97 = vsyncpa [#allocation3], 1
    %98 = vsyncpa [#allocation6], 1
    %99 = vsyncpa [#allocation4], 1
    %100 = vsyncpa [#allocation9], 1

</llo_original>
